<compile_context>
chip_gen: v6e
topology: v6e:2x2x1
jax: 0.10.0
libtpu: 0.0.40
codegen_flags: <defaults>
</compile_context>

<pallas_src>
import jax
import jax.numpy as jnp
from jax.experimental import pallas as pl
from jax.experimental.pallas import tpu as pltpu


def _round_up(x, m):
    return ((x + m - 1) // m) * m


def ahaf_kernel(bg_ref, x_ref, o_ref):
    # bg_ref: VMEM (TILE_R, 2) f32; column 0 = beta, column 1 = gamma (per row).
    # x_ref / o_ref: VMEM (TILE_R, TILE_C) tiles in the input dtype.
    u = x_ref[...].astype(jnp.float32)
    beta = bg_ref[:, 0:1]    # (TILE_R, 1) -> lane broadcast
    gamma = bg_ref[:, 1:2]   # (TILE_R, 1) -> lane broadcast
    y = (beta * u) * jax.nn.sigmoid(gamma * u)
    o_ref[...] = y.astype(o_ref.dtype)


def ahaf_forward(x, beta, gamma, *, tile_rows=None, tile_cols=None):
    """AHAF forward: y = beta * x * sigmoid(gamma * x).

    x: (N, C, H, W); beta, gamma: (1, C, 1, 1) (broadcast over N, H, W).
    """
    N, C, H, W = x.shape
    HW = H * W
    rows = N * C
    itemsize = jnp.dtype(x.dtype).itemsize
    # Packed sublane multiple for the dtype (f32: 8, bf16: 16, int8/fp8: 32).
    sub = {4: 8, 2: 16, 1: 32}.get(itemsize, 8)

    # --- views only: no HBM copies / pads of x ---
    x2 = x.reshape(rows, HW)

    # --- combined per-row params: (rows, 2) f32, col 0 = beta, col 1 = gamma ---
    bg = jnp.stack(
        [beta.reshape(C).astype(jnp.float32),
         gamma.reshape(C).astype(jnp.float32)], axis=-1)             # (C, 2)
    bg_rows = jnp.broadcast_to(bg[None], (N, C, 2)).reshape(rows, 2)  # tiny

    # --- tile sizing: mem-bound kernel, ~1-2 MiB data tiles hit ~85-90% roofline ---
    data_budget = 10 * 1024 * 1024  # total double-buffered in+out+param bytes

    if tile_cols is None:
        if HW % 128 == 0:
            # Lane dim tileable in multiples of 128 (unmasked, lane-dense vst).
            max_cols = max(128,
                           ((2 * 1024 * 1024) // (sub * itemsize) // 128) * 128)
            tile_cols = min(HW, max_cols)
        else:
            # Full-extent last dim is exempt from the 128-divisibility rule;
            # masked edge stores beat an extra full-tensor HBM padding pass.
            tile_cols = HW

    if tile_rows is None:
        # Per grid step: 2 pipeline bufs x (in + out) data tiles, plus 2 bufs of
        # the (tile_rows, 2) param block which lane-pads to 128 (512 B per row).
        per_row_bytes = 4 * tile_cols * itemsize + 2 * 512
        tile_rows = max(sub, (data_budget // per_row_bytes) // sub * sub)
        # Keep >= ~8 row steps when possible (v7x megacore + pipelining).
        tile_rows = min(tile_rows, max(sub, _round_up(pl.cdiv(rows, 8), sub)))
        tile_rows = min(tile_rows, _round_up(rows, sub))

    n_row = pl.cdiv(rows, tile_rows)
    n_col = pl.cdiv(HW, tile_cols)

    est_vmem = tile_rows * (4 * tile_cols * itemsize + 2 * 512)
    vmem_limit = max(32 * 1024 * 1024, est_vmem + 4 * 1024 * 1024)

    out = pl.pallas_call(
        ahaf_kernel,
        out_shape=jax.ShapeDtypeStruct((rows, HW), x.dtype),
        grid=(n_row, n_col),
        in_specs=[
            pl.BlockSpec((tile_rows, 2), lambda i, j: (i, 0)),          # beta/gamma
            pl.BlockSpec((tile_rows, tile_cols), lambda i, j: (i, j)),  # x
        ],
        out_specs=pl.BlockSpec((tile_rows, tile_cols), lambda i, j: (i, j)),
        compiler_params=pltpu.CompilerParams(
            dimension_semantics=("parallel", "parallel"),
            vmem_limit_bytes=vmem_limit),
        cost_estimate=pl.CostEstimate(
            flops=5 * rows * HW,
            transcendentals=rows * HW,
            bytes_accessed=2 * rows * HW * itemsize + rows * 2 * 4),
    )(bg_rows, x2)

    return out.reshape(N, C, H, W)


if __name__ == "__main__":
    N, C, H, W = 2, 4, 16, 16

    key = jax.random.PRNGKey(0)
    x = jax.random.normal(key, (N, C, H, W), dtype=jnp.float32)

    # Deterministic params matching AHAF.__init__(size=(1,C,1,1), init_as='ReLU').
    gamma = jnp.ones((1, C, 1, 1), dtype=jnp.float32) * (2.0 ** 16)
    beta = jnp.ones((1, C, 1, 1), dtype=jnp.float32)

    y = ahaf_forward(x, beta, gamma)
    y = jax.block_until_ready(y)

    # Reference check (plain JAX, same formula / broadcasting as PyTorch).
    y_ref = beta * x * jax.nn.sigmoid(gamma * x)
    assert y.shape == x.shape and y.dtype == x.dtype
    assert jnp.allclose(y, y_ref, atol=1e-6, rtol=1e-6)

    print("KERNEL_OK")
</pallas_src>

<mosaic_0001>
module attributes {stable_mosaic.version = 11 : i64} {
  func.func @ahaf_kernel(%arg0: i32, %arg1: i32, %arg2: memref<8x2xf32, #tpu.memory_space<vmem>>, %arg3: memref<8x256xf32, #tpu.memory_space<vmem>>, %arg4: memref<8x256xf32, #tpu.memory_space<vmem>>) attributes {dimension_semantics = [#tpu.dimension_semantics<parallel>, #tpu.dimension_semantics<parallel>], iteration_bounds = array<i64: 1, 1>, scalar_prefetch = 0 : i64, scratch_operands = 0 : i64, tpu.core_type = #tpu.core_type<tc>, window_params = [{transform_indices = @transform_0, window_bounds = array<i64: 8, 2>}, {transform_indices = @transform_1, window_bounds = array<i64: 8, 256>}, {transform_indices = @transform_2, window_bounds = array<i64: 8, 256>}]} {
    %c0 = arith.constant 0 : index
    %c0_0 = arith.constant 0 : index
    %0 = vector.load %arg3[%c0, %c0_0] : memref<8x256xf32, #tpu.memory_space<vmem>>, vector<8x256xf32>
    %c0_1 = arith.constant 0 : index
    %c0_2 = arith.constant 0 : index
    %1 = vector.load %arg2[%c0_1, %c0_2] : memref<8x2xf32, #tpu.memory_space<vmem>>, vector<8x1xf32>
    %c0_3 = arith.constant 0 : index
    %c1 = arith.constant 1 : index
    %2 = vector.load %arg2[%c0_3, %c1] : memref<8x2xf32, #tpu.memory_space<vmem>>, vector<8x1xf32>
    %3 = vector.broadcast %1 : vector<8x1xf32> to vector<8x256xf32>
    %4 = arith.mulf %3, %0 : vector<8x256xf32>
    %5 = vector.broadcast %2 : vector<8x1xf32> to vector<8x256xf32>
    %6 = arith.mulf %5, %0 : vector<8x256xf32>
    %7 = arith.negf %6 : vector<8x256xf32>
    %8 = math.exp %7 : vector<8x256xf32>
    %cst = arith.constant 1.000000e+00 : f32
    %9 = vector.broadcast %cst : f32 to vector<8x256xf32>
    %10 = arith.addf %9, %8 : vector<8x256xf32>
    %11 = arith.divf %9, %10 : vector<8x256xf32>
    %12 = arith.mulf %4, %11 : vector<8x256xf32>
    %c0_4 = arith.constant 0 : index
    %c0_5 = arith.constant 0 : index
    %13 = vector.load %arg4[%c0_4, %c0_5] : memref<8x256xf32, #tpu.memory_space<vmem>>, vector<8x256xf32>
    tpu.vector_store %arg4[%c0_4, %c0_5], %12 {strides = array<i32>} : memref<8x256xf32, #tpu.memory_space<vmem>>, vector<8x256xf32>,
    return
  }
  func.func @transform_0(%arg0: i32, %arg1: i32) -> (i32, i32) {
    %c0_i32 = arith.constant 0 : i32
    %c0_i32_0 = arith.constant 0 : i32
    return %arg0, %c0_i32 : i32, i32
  }
  func.func @transform_1(%arg0: i32, %arg1: i32) -> (i32, i32) {
    %c0_i32 = arith.constant 0 : i32
    return %arg0, %arg1 : i32, i32
  }
  func.func @transform_2(%arg0: i32, %arg1: i32) -> (i32, i32) {
    %c0_i32 = arith.constant 0 : i32
    return %arg0, %arg1 : i32, i32
  }
}

</mosaic_0001>

<llo_original>
// kernel: tpu_custom_call.1
$region0: #{tpu_custom_call.1}
  #allocation0 [shape = 'u32[]', space=smem, size = 0x4, offset = 0x4, fixed_abs, tag = 'smem constant byte address 0x4 - core index']
  #allocation1 [shape = 'u32[144,128]{1,0:T(1,128)}', space=vmem, size = 0x12000, scoped, tag = 'internal scratch']
  %s0 = inlined_call_operand.vmem [shape: f32[8,2], index: 0, kind: input, shape index: {}]
  %s1 = inlined_call_operand.hbm [shape: f32[8,256], index: 1, kind: input, shape index: {}]
  %s2 = inlined_call_operand.hbm [shape: f32[8,256], index: 2, kind: output, shape index: {}]
  %s3 = sld [smem:[#allocation0]]
  $region22: #{tpu_custom_call.1} parent=0
    _
  %s5 = ssub.s32 1, %s3
  %s6 = scalar_select 0, %s5, %s3
  $region1: #{tpu_custom_call.1} parent=0
    #allocation2 [shape = 'u8[8192]{0}', space=vmem, size = 0x2000, scoped, tag = 'input window, operand 1, single buffered']
    #allocation3 [shape = 's32[1]{0}', space=sflag, size = 0x4, scoped, tag = 'scoped memory for tpu_custom_call.1']
    #allocation4 [shape = 's32[1]{0}', space=sflag, size = 0x4, scoped, tag = 'scoped memory for tpu_custom_call.1']
    #allocation5 [shape = 'u8[8192]{0}', space=vmem, size = 0x2000, scoped, tag = 'output window, operand 0, single buffered']
    %7 = vsyncpa [#allocation3], 0
    %8 = vsyncpa [#allocation4], 0
    // Predicated region
    $region2: #{tpu_custom_call.1} parent=1 // pred_check
      _
    $region3: #{tpu_custom_call.1} parent=1 // pred_check_branch
      %10 = sbr.rel (0) target = $region5
    $region4: #{tpu_custom_call.1} parent=1 // pred_region
      _
    $region5: #{tpu_custom_call.1} parent=1 // pred_fallthru
      _
    // Predicated region
    $region6: #{tpu_custom_call.1} parent=1 // pred_check
      _
    $region7: #{tpu_custom_call.1} parent=1 // pred_check_branch
      %12 = sbr.rel (0) target = $region9
    $region8: #{tpu_custom_call.1} parent=1 // pred_region
      %s14 = ssub.s32 256, 256
      %15 = vsyncadd [#allocation3], %s14
      %s17 = sshll.u32 [#allocation2], 4
      %s18 = int_to_ptr.vmem [resolvable:$true] %s17
      %20 = dma.hbm_to_vmem [thread:$0]  %s1, 256, %s18, [#allocation3]
    $region9: #{tpu_custom_call.1} parent=1 // pred_fallthru
      _
    // Predicated region
    $region10: #{tpu_custom_call.1} parent=1 // pred_check
      _
    $region11: #{tpu_custom_call.1} parent=1 // pred_check_branch
      %22 = sbr.rel (0) target = $region13
    $region12: #{tpu_custom_call.1} parent=1 // pred_region
      %23 = dma.done [#allocation3], 256
    $region13: #{tpu_custom_call.1} parent=1 // pred_fallthru
      _
    %v24 = vld [vmem:[#allocation2] sm:$0xff]
    %v25 = vld [vmem:[#allocation2 + $0x8] sm:$0xff]
    %v26 = vld [vmem:[%s0] sm:$0xff]
    %28 = vset.pattern.permute.xlu0 0
    %29 = vperm.xlu0 %28, %v26
    %v30 = vpop.permute.xlu0 %29
    %v32 = vmul.f32 %v30, %v24
    %v33 = vmul.f32 %v30, %v25
    %34 = vset.pattern.permute.xlu0 1
    %35 = vperm.xlu0 %34, %v26
    %v36 = vpop.permute.xlu0 %35
    %v38 = vmul.f32 %v36, %v24
    %v39 = vmul.f32 %v36, %v25
    %v40 = vxor.u32 %v38, 2147483648
    %v41 = vxor.u32 %v39, 2147483648
    %v42 = vmul.f32 %v40, 1.442695
    %v43 = vpow.pop %v42
    %v44 = vmul.f32 %v41, 1.442695
    %v45 = vpow.pop %v44
    %v46 = vadd.f32 %v43, 1.0
    %v47 = vadd.f32 %v45, 1.0
    %v48 = vrcp.pop %v46
    %v49 = vmul.f32 1.0, %v48
    %v50 = vrcp.pop %v47
    %v51 = vmul.f32 1.0, %v50
    %v52 = vmul.f32 %v32, %v49
    %v53 = vmul.f32 %v33, %v51
    %54 = vst [vmem:[#allocation5] sm:$0xff] %v52
    %55 = vst [vmem:[#allocation5 + $0x8] sm:$0xff] %v53
    // Predicated region
    $region14: #{tpu_custom_call.1} parent=1 // pred_check
      _
    $region15: #{tpu_custom_call.1} parent=1 // pred_check_branch
      %57 = sbr.rel (0) target = $region17
    $region16: #{tpu_custom_call.1} parent=1 // pred_region
      %s59 = ssub.s32 256, 256
      %60 = vsyncadd [#allocation4], %s59
      %s62 = sshll.u32 [#allocation5], 4
      %s63 = int_to_ptr.vmem [resolvable:$true] %s62
      %65 = dma.vmem_to_hbm [thread:$0]  %s63, 256, %s2, [#allocation4]
    $region17: #{tpu_custom_call.1} parent=1 // pred_fallthru
      _
    // Predicated region
    $region18: #{tpu_custom_call.1} parent=1 // pred_check
      _
    $region19: #{tpu_custom_call.1} parent=1 // pred_check_branch
      %67 = sbr.rel (0) target = $region21
    $region20: #{tpu_custom_call.1} parent=1 // pred_region
      %68 = dma.done [#allocation4], 256
    $region21: #{tpu_custom_call.1} parent=1 // pred_fallthru
      _
    %69 = vsyncpa [#allocation3], 1
    %70 = vsyncpa [#allocation4], 1

</llo_original>
